<compile_context>
chip_gen: v7x
topology: tpu7x:2x2x1
jax: 0.10.0
libtpu: 0.0.40
codegen_flags: <defaults>
</compile_context>

<pallas_src>
import functools
import numpy as np
import jax
import jax.numpy as jnp
from jax.experimental import pallas as pl
from jax.experimental.pallas import tpu as pltpu

HP = 128  # fused + lane-padded hidden / output width (actor 0:32, critic 32:64, rest zero)


def fused_actor_critic_kernel(obs_ref, w_ref, b_ref, out_ref, *, op8):
    """One batch tile: 3 matmuls + 2 tanh over the fused (actor|critic) network."""
    x = obs_ref[...]                                # (B_TILE, op8)

    w1 = w_ref[0:op8, :]                            # (op8, 128)  concat  [aw1 | cw1 | 0]
    w2 = w_ref[op8:op8 + HP, :]                     # (128, 128)  blockdiag(aw2, cw2)
    w3 = w_ref[op8 + HP:op8 + 2 * HP, :]            # (128, 128)  blockdiag(awo, cwo)
    b1 = b_ref[0:1, :]
    b2 = b_ref[1:2, :]
    b3 = b_ref[2:3, :]

    h = jnp.tanh(jnp.dot(x, w1, preferred_element_type=jnp.float32) + b1)
    h = jnp.tanh(jnp.dot(h, w2, preferred_element_type=jnp.float32) + b2)
    out_ref[...] = (jnp.dot(h, w3, preferred_element_type=jnp.float32)
                    + b3).astype(out_ref.dtype)


def pack_actor_critic_params(actor_params, critic_params, obs_dim):
    """Build the fused weight slab + bias slab ONCE (outside the hot call)."""
    H = actor_params["w1"].shape[1]                 # 32
    act_dim = actor_params["wo"].shape[1]
    assert 2 * H <= HP and act_dim + 1 <= HP
    op8 = ((obs_dim + 7) // 8) * 8                  # sublane-aligned obs width

    # Layer 1: concatenate actor/critic first layers along the output dim.
    w1p = jnp.zeros((op8, HP), jnp.float32)
    w1p = w1p.at[:obs_dim, :H].set(actor_params["w1"])
    w1p = w1p.at[:obs_dim, H:2 * H].set(critic_params["w1"])

    # Layer 2: block-diagonal so actor/critic hidden states stay independent.
    w2p = jnp.zeros((HP, HP), jnp.float32)
    w2p = w2p.at[:H, :H].set(actor_params["w2"])
    w2p = w2p.at[H:2 * H, H:2 * H].set(critic_params["w2"])

    # Output layer: actor logits in cols [0:act_dim], critic value in col [act_dim].
    w3p = jnp.zeros((HP, HP), jnp.float32)
    w3p = w3p.at[:H, :act_dim].set(actor_params["wo"])
    w3p = w3p.at[H:2 * H, act_dim:act_dim + 1].set(critic_params["wo"])

    w_slab = jnp.concatenate([w1p, w2p, w3p], axis=0)      # (op8 + 256, 128)

    b_slab = jnp.zeros((8, HP), jnp.float32)                # pad rows to a full (8,128) tile
    b_slab = b_slab.at[0, :H].set(actor_params["b1"].reshape(-1))
    b_slab = b_slab.at[0, H:2 * H].set(critic_params["b1"].reshape(-1))
    b_slab = b_slab.at[1, :H].set(actor_params["b2"].reshape(-1))
    b_slab = b_slab.at[1, H:2 * H].set(critic_params["b2"].reshape(-1))
    b_slab = b_slab.at[2, :act_dim].set(actor_params["bo"].reshape(-1))
    b_slab = b_slab.at[2, act_dim:act_dim + 1].set(critic_params["bo"].reshape(-1))

    return {"w_slab": w_slab, "b_slab": b_slab, "op8": op8, "act_dim": act_dim,
            "obs_dim": obs_dim}


def mlp_actor_critic_forward(obs, packed, *, block_b=128):
    """Returns (act_net, val_net) = (actor.net(obs), critic.net(obs))."""
    B, obs_dim = obs.shape
    op8 = packed["op8"]
    act_dim = packed["act_dim"]
    w_slab = packed["w_slab"]
    b_slab = packed["b_slab"]

    # Pad batch rows to a multiple of the tile and features to sublane alignment.
    b_pad = ((B + block_b - 1) // block_b) * block_b
    obs_p = jnp.zeros((b_pad, op8), jnp.float32).at[:B, :obs_dim].set(obs)

    n_tiles = b_pad // block_b
    w_rows = w_slab.shape[0]

    flops = 2 * b_pad * (op8 * HP + HP * HP + HP * HP)
    transcendentals = 2 * b_pad * HP
    bytes_accessed = 4 * (obs_p.size + w_slab.size + b_slab.size + b_pad * HP)

    out = pl.pallas_call(
        functools.partial(fused_actor_critic_kernel, op8=op8),
        out_shape=jax.ShapeDtypeStruct((b_pad, HP), jnp.float32),
        grid_spec=pltpu.PrefetchScalarGridSpec(
            num_scalar_prefetch=0,
            grid=(n_tiles,),
            in_specs=[
                pl.BlockSpec((block_b, op8), lambda i: (i, 0)),     # obs tile
                pl.BlockSpec((w_rows, HP), lambda i: (0, 0)),       # weights, VMEM-resident
                pl.BlockSpec((8, HP), lambda i: (0, 0)),            # biases, VMEM-resident
            ],
            out_specs=pl.BlockSpec((block_b, HP), lambda i: (i, 0)),  # lane-dense output
        ),
        compiler_params=pltpu.CompilerParams(
            dimension_semantics=("parallel",)),
        cost_estimate=pl.CostEstimate(flops=flops,
                                      transcendentals=transcendentals,
                                      bytes_accessed=bytes_accessed),
    )(obs_p, w_slab, b_slab)

    act_net = out[:B, :act_dim]
    val_net = out[:B, act_dim:act_dim + 1]
    return act_net, val_net


# ------------------- deterministic parameter init -------------------
def orthogonal_weight(key, out_dim, in_dim, gain):
    """Mimics torch.nn.init.orthogonal_ on a (out, in) Linear weight,
    then returns it transposed to (in, out) for x @ W."""
    rows, cols = out_dim, in_dim
    a = jax.random.normal(key, (rows, cols), dtype=jnp.float32)
    transposed = rows < cols
    if transposed:
        a = a.T
    q, r = jnp.linalg.qr(a)
    d = jnp.sign(jnp.diag(r))
    q = q * d[None, :]
    if transposed:
        q = q.T
    w = gain * q                      # (out, in)
    return w.T.astype(jnp.float32)    # (in, out)


def make_mlp_params(key, obs_dim, hidden_sizes, out_dim, out_gain):
    ks = jax.random.split(key, len(hidden_sizes) + 1)
    dims = [obs_dim] + list(hidden_sizes)
    params = {}
    gain = float(np.sqrt(2.0))
    for i in range(len(hidden_sizes)):
        params[f"w{i + 1}"] = orthogonal_weight(ks[i], dims[i + 1], dims[i], gain)
        params[f"b{i + 1}"] = jnp.zeros((dims[i + 1],), dtype=jnp.float32)
    params["wo"] = orthogonal_weight(ks[-1], out_dim, dims[-1], out_gain)
    params["bo"] = jnp.zeros((out_dim,), dtype=jnp.float32)
    return params


if __name__ == "__main__":
    # PPO rollout-sized batch (not a multiple of the tile, to exercise padding).
    B, OBS_DIM, ACT_DIM = 200, 16, 4
    HIDDEN = [32, 32]
    B_TILE = 128

    key = jax.random.PRNGKey(0)
    k_obs, k_actor, k_critic = jax.random.split(key, 3)

    obs = jax.random.normal(k_obs, (B, OBS_DIM), dtype=jnp.float32)

    # Actor output layer gain = 0.01, critic output layer gain = 1 (as in the module).
    actor_params = make_mlp_params(k_actor, OBS_DIM, HIDDEN, ACT_DIM, out_gain=0.01)
    critic_params = make_mlp_params(k_critic, OBS_DIM, HIDDEN, 1, out_gain=1.0)

    # Pack once (would be cached across PPO steps in real use).
    packed = pack_actor_critic_params(actor_params, critic_params, OBS_DIM)

    act_net, val_net = mlp_actor_critic_forward(obs, packed, block_b=B_TILE)
    jax.block_until_ready((act_net, val_net))

    # Pure-JAX reference on the original (unfused) parameters.
    def ref_mlp(x, p):
        h = jnp.tanh(x @ p["w1"] + p["b1"][None, :])
        h = jnp.tanh(h @ p["w2"] + p["b2"][None, :])
        return h @ p["wo"] + p["bo"][None, :]

    ref_act = ref_mlp(obs, actor_params)
    ref_val = ref_mlp(obs, critic_params)
    assert act_net.shape == (B, ACT_DIM) and val_net.shape == (B, 1)
    np.testing.assert_allclose(np.asarray(act_net), np.asarray(ref_act), rtol=1e-5, atol=1e-5)
    np.testing.assert_allclose(np.asarray(val_net), np.asarray(ref_val), rtol=1e-5, atol=1e-5)

    print("KERNEL_OK")
</pallas_src>

<mosaic_0001>
module attributes {stable_mosaic.version = 11 : i64} {
  func.func @fused_actor_critic_kernel(%arg0: i32, %arg1: memref<128x16xf32, #tpu.memory_space<vmem>>, %arg2: memref<272x128xf32, #tpu.memory_space<vmem>>, %arg3: memref<8x128xf32, #tpu.memory_space<vmem>>, %arg4: memref<128x128xf32, #tpu.memory_space<vmem>>) attributes {dimension_semantics = [#tpu.dimension_semantics<parallel>], iteration_bounds = array<i64: 2>, scalar_prefetch = 0 : i64, scratch_operands = 0 : i64, tpu.core_type = #tpu.core_type<tc>, window_params = [{transform_indices = @transform_0, window_bounds = array<i64: 128, 16>}, {pipeline_mode = #tpu.pipeline_mode<synchronous>, transform_indices = @transform_1, window_bounds = array<i64: 272, 128>}, {pipeline_mode = #tpu.pipeline_mode<synchronous>, transform_indices = @transform_2, window_bounds = array<i64: 8, 128>}, {transform_indices = @transform_3, window_bounds = array<i64: 128, 128>}]} {
    %c0 = arith.constant 0 : index
    %c0_0 = arith.constant 0 : index
    %0 = vector.load %arg1[%c0, %c0_0] : memref<128x16xf32, #tpu.memory_space<vmem>>, vector<128x16xf32>
    %c0_1 = arith.constant 0 : index
    %c0_2 = arith.constant 0 : index
    %1 = vector.load %arg2[%c0_1, %c0_2] : memref<272x128xf32, #tpu.memory_space<vmem>>, vector<16x128xf32>
    %c16 = arith.constant 16 : index
    %c0_3 = arith.constant 0 : index
    %2 = vector.load %arg2[%c16, %c0_3] : memref<272x128xf32, #tpu.memory_space<vmem>>, vector<128x128xf32>
    %c144 = arith.constant 144 : index
    %c0_4 = arith.constant 0 : index
    %3 = vector.load %arg2[%c144, %c0_4] : memref<272x128xf32, #tpu.memory_space<vmem>>, vector<128x128xf32>
    %c0_5 = arith.constant 0 : index
    %c0_6 = arith.constant 0 : index
    %4 = vector.load %arg3[%c0_5, %c0_6] : memref<8x128xf32, #tpu.memory_space<vmem>>, vector<1x128xf32>
    %c1 = arith.constant 1 : index
    %c0_7 = arith.constant 0 : index
    %5 = vector.load %arg3[%c1, %c0_7] : memref<8x128xf32, #tpu.memory_space<vmem>>, vector<1x128xf32>
    %c2 = arith.constant 2 : index
    %c0_8 = arith.constant 0 : index
    %6 = vector.load %arg3[%c2, %c0_8] : memref<8x128xf32, #tpu.memory_space<vmem>>, vector<1x128xf32>
    %cst = arith.constant dense<0.000000e+00> : vector<128x128xf32>
    %7 = tpu.matmul %0, %1, %cst {dimension_numbers = #tpu.dot_dimension_numbers<[1], [0], [0], [1], [0, 0, 1, 1], [], []>} : vector<128x16xf32>, vector<16x128xf32>, vector<128x128xf32> -> vector<128x128xf32>
    %8 = vector.broadcast %4 : vector<1x128xf32> to vector<128x128xf32>
    %9 = arith.addf %7, %8 : vector<128x128xf32>
    %10 = math.tanh %9 : vector<128x128xf32>
    %cst_9 = arith.constant dense<0.000000e+00> : vector<128x128xf32>
    %11 = tpu.matmul %10, %2, %cst_9 {dimension_numbers = #tpu.dot_dimension_numbers<[1], [0], [0], [1], [0, 0, 1, 1], [], []>} : vector<128x128xf32>, vector<128x128xf32>, vector<128x128xf32> -> vector<128x128xf32>
    %12 = vector.broadcast %5 : vector<1x128xf32> to vector<128x128xf32>
    %13 = arith.addf %11, %12 : vector<128x128xf32>
    %14 = math.tanh %13 : vector<128x128xf32>
    %cst_10 = arith.constant dense<0.000000e+00> : vector<128x128xf32>
    %15 = tpu.matmul %14, %3, %cst_10 {dimension_numbers = #tpu.dot_dimension_numbers<[1], [0], [0], [1], [0, 0, 1, 1], [], []>} : vector<128x128xf32>, vector<128x128xf32>, vector<128x128xf32> -> vector<128x128xf32>
    %16 = vector.broadcast %6 : vector<1x128xf32> to vector<128x128xf32>
    %17 = arith.addf %15, %16 : vector<128x128xf32>
    %c0_11 = arith.constant 0 : index
    %c0_12 = arith.constant 0 : index
    %18 = vector.load %arg4[%c0_11, %c0_12] : memref<128x128xf32, #tpu.memory_space<vmem>>, vector<128x128xf32>
    tpu.vector_store %arg4[%c0_11, %c0_12], %17 {strides = array<i32>} : memref<128x128xf32, #tpu.memory_space<vmem>>, vector<128x128xf32>,
    return
  }
  func.func @transform_0(%arg0: i32) -> (i32, i32) {
    %c0_i32 = arith.constant 0 : i32
    %c0_i32_0 = arith.constant 0 : i32
    return %arg0, %c0_i32 : i32, i32
  }
  func.func @transform_1(%arg0: i32) -> (i32, i32) {
    %c0_i32 = arith.constant 0 : i32
    %c0_i32_0 = arith.constant 0 : i32
    %c0_i32_1 = arith.constant 0 : i32
    return %c0_i32, %c0_i32_0 : i32, i32
  }
  func.func @transform_2(%arg0: i32) -> (i32, i32) {
    %c0_i32 = arith.constant 0 : i32
    %c0_i32_0 = arith.constant 0 : i32
    %c0_i32_1 = arith.constant 0 : i32
    return %c0_i32, %c0_i32_0 : i32, i32
  }
  func.func @transform_3(%arg0: i32) -> (i32, i32) {
    %c0_i32 = arith.constant 0 : i32
    %c0_i32_0 = arith.constant 0 : i32
    return %arg0, %c0_i32 : i32, i32
  }
}

</mosaic_0001>

<llo_original>
// kernel: tpu_custom_call.1
$region0: #{tpu_custom_call.1}
  #allocation0 [shape = 'u32[]', space=smem, size = 0x4, offset = 0x4, fixed_abs, tag = 'smem constant byte address 0x4 - core index']
  #allocation1 [shape = 'u32[144,128]{1,0:T(1,128)}', space=vmem, size = 0x12000, scoped, tag = 'internal scratch']
  %s0 = inlined_call_operand.vmem [shape: f32[256,16], index: 0, kind: input, shape index: {}]
  %s1 = inlined_call_operand.vmem [shape: f32[272,128], index: 1, kind: input, shape index: {}]
  %s2 = inlined_call_operand.vmem [shape: f32[8,128], index: 2, kind: input, shape index: {}]
  %s3 = inlined_call_operand.hbm [shape: f32[256,128], index: 3, kind: output, shape index: {}]
  %s4 = sld [smem:[#allocation0]]
  $region45: #{tpu_custom_call.1} parent=0
    _
  %s6 = ssub.s32 1, %s4
  %s7 = scalar_select 0, %s6, %s4
  $region1: #{tpu_custom_call.1} parent=0
    #allocation2 [shape = 'u8[131072]{0}', space=vmem, size = 0x20000, scoped, tag = 'output window, operand 0']
    #allocation3 [shape = 's32[2]{0}', space=sflag, size = 0x8, scoped, tag = 'scoped memory for tpu_custom_call.1']
    %8 = vsyncpa [#allocation3], 0
    %s9 = scalar_lea.sflag [#allocation3], 1
    %10 = vsyncpa %s9, 0
    loop: start=0, step=1, limit=4
    $region2: #{tpu_custom_call.1} parent=1 // loop_pre_header
      _
    $region3: #{tpu_custom_call.1} parent=1 // loop_header
      %s12 = sphi 0, %s16
      %p13 = scmp.ge.s32.totalorder %s12, 4
      %s22 = sphi 0, %s24
      %s25 = sphi 0, %s22
      %s26 = sphi 0, %s25
      %s42 = sphi 0, %s26
      %s46 = sphi 0, %s46
      %s48 = sphi 0, %s46
      %s49 = sphi 0, %s48
      %s63 = sphi 0, %s49
      %s67 = sphi 0, %s67
      %s69 = sphi 0, %s67
      %s70 = sphi 0, %s69
      %s84 = sphi 0, %s70
      %s90 = sphi 0, %s92
      %s93 = sphi 0, %s90
      %s94 = sphi 0, %s93
      %s110 = sphi 0, %s94
    $region4: #{tpu_custom_call.1} parent=1 // loop_header_branch
      %15 = sbr.rel (%p13) target = $region8
    $region5: #{tpu_custom_call.1} parent=1 // loop_body
      %s17 = ssub.s32 %s12, 1
      %s18 = ssub.s32 %s12, 2
      %s19 = sadd.s32 %s12, 1
      %s20 = ssub.s32 %s12, %s19
      %p21 = scmp.eq.s32.totalorder %s20, 0
      %s23 = sadd.s32 %s22, 1
      %s24 = scalar_select %p21, %s22, %s23
      %p27 = pneg %p21
      %p28 = scmp.eq.s32.totalorder %s12, 1
      %p29 = por %p27, %p28
      %p30 = scmp.ne.s32.totalorder %s22, %s25
      %p31 = scmp.eq.s32.totalorder %s12, 0
      %p32 = por %p30, %p31
      %p33 = scmp.ne.s32.totalorder %s22, %s25
      %p34 = scmp.eq.s32.totalorder %s17, 1
      %p35 = por %p33, %p34
      %p36 = scmp.ne.s32.totalorder %s25, %s26
      %p37 = scmp.eq.s32.totalorder %s17, 0
      %p38 = por %p36, %p37
      %p39 = scmp.ne.s32.totalorder %s25, %s26
      %p40 = scmp.eq.s32.totalorder %s18, 1
      %p41 = por %p39, %p40
      %p43 = scmp.ne.s32.totalorder %s26, %s42
      %p44 = scmp.eq.s32.totalorder %s18, 0
      %p45 = por %p43, %p44
      %s47 = sadd.s32 %s46, 1
      %p50 = scmp.eq.s32.totalorder %s12, 1
      %p51 = scmp.ne.s32.totalorder %s46, %s48
      %p52 = scmp.eq.s32.totalorder %s12, 0
      %p53 = por %p51, %p52
      %p54 = scmp.ne.s32.totalorder %s46, %s48
      %p55 = scmp.eq.s32.totalorder %s17, 1
      %p56 = por %p54, %p55
      %p57 = scmp.ne.s32.totalorder %s48, %s49
      %p58 = scmp.eq.s32.totalorder %s17, 0
      %p59 = por %p57, %p58
      %p60 = scmp.ne.s32.totalorder %s48, %s49
      %p61 = scmp.eq.s32.totalorder %s18, 1
      %p62 = por %p60, %p61
      %p64 = scmp.ne.s32.totalorder %s49, %s63
      %p65 = scmp.eq.s32.totalorder %s18, 0
      %p66 = por %p64, %p65
      %s68 = sadd.s32 %s67, 1
      %p71 = scmp.eq.s32.totalorder %s12, 1
      %p72 = scmp.ne.s32.totalorder %s67, %s69
      %p73 = scmp.eq.s32.totalorder %s12, 0
      %p74 = por %p72, %p73
      %p75 = scmp.ne.s32.totalorder %s67, %s69
      %p76 = scmp.eq.s32.totalorder %s17, 1
      %p77 = por %p75, %p76
      %p78 = scmp.ne.s32.totalorder %s69, %s70
      %p79 = scmp.eq.s32.totalorder %s17, 0
      %p80 = por %p78, %p79
      %p81 = scmp.ne.s32.totalorder %s69, %s70
      %p82 = scmp.eq.s32.totalorder %s18, 1
      %p83 = por %p81, %p82
      %p85 = scmp.ne.s32.totalorder %s70, %s84
      %p86 = scmp.eq.s32.totalorder %s18, 0
      %p87 = por %p85, %p86
      %s88 = ssub.s32 %s12, %s19
      %p89 = scmp.eq.s32.totalorder %s88, 0
      %s91 = sadd.s32 %s90, 1
      %s92 = scalar_select %p89, %s90, %s91
      %p95 = pneg %p89
      %p96 = scmp.eq.s32.totalorder %s12, 1
      %p97 = por %p95, %p96
      %p98 = scmp.ne.s32.totalorder %s90, %s93
      %p99 = scmp.eq.s32.totalorder %s12, 0
      %p100 = por %p98, %p99
      %p101 = scmp.ne.s32.totalorder %s90, %s93
      %p102 = scmp.eq.s32.totalorder %s17, 1
      %p103 = por %p101, %p102
      %p104 = scmp.ne.s32.totalorder %s93, %s94
      %p105 = scmp.eq.s32.totalorder %s17, 0
      %p106 = por %p104, %p105
      %p107 = scmp.ne.s32.totalorder %s93, %s94
      %p108 = scmp.eq.s32.totalorder %s18, 1
      %p109 = por %p107, %p108
      %p111 = scmp.ne.s32.totalorder %s94, %s110
      %p112 = scmp.eq.s32.totalorder %s18, 0
      %p113 = por %p111, %p112
      %p114 = scmp.le.s32.totalorder 1, %s12
      %p115 = scmp.lt.s32.totalorder %s12, 3
      %p116 = pnand %p114, %p115
      %p117 = pneg %p116
      // Predicated region
      $region9: #{tpu_custom_call.1} parent=5 // pred_check
        _
      $region10: #{tpu_custom_call.1} parent=5 // pred_check_branch
        %119 = sbr.rel (%p116) target = $region12
      $region11: #{tpu_custom_call.1} parent=5 // pred_region
        %s120 = ssub.s32 %s12, 1
        // Predicated region
        $region13: #{tpu_custom_call.1} parent=11 // pred_check
          %p121 = pneg %p59
        $region14: #{tpu_custom_call.1} parent=11 // pred_check_branch
          %123 = sbr.rel (%p121) target = $region16
        $region15: #{tpu_custom_call.1} parent=11 // pred_region
          _
        $region16: #{tpu_custom_call.1} parent=11 // pred_fallthru
          _
        // Predicated region
        $region17: #{tpu_custom_call.1} parent=11 // pred_check
          %p124 = pneg %p80
        $region18: #{tpu_custom_call.1} parent=11 // pred_check_branch
          %126 = sbr.rel (%p124) target = $region20
        $region19: #{tpu_custom_call.1} parent=11 // pred_region
          _
        $region20: #{tpu_custom_call.1} parent=11 // pred_fallthru
          _
      $region12: #{tpu_custom_call.1} parent=5 // pred_fallthru
        _
      %p127 = scmp.lt.s32.totalorder %s12, 2
      // Predicated region
      $region21: #{tpu_custom_call.1} parent=5 // pred_check
        %p128 = pneg %p127
      $region22: #{tpu_custom_call.1} parent=5 // pred_check_branch
        %130 = sbr.rel (%p128) target = $region24
      $region23: #{tpu_custom_call.1} parent=5 // pred_region
        // Predicated region
        $region25: #{tpu_custom_call.1} parent=23 // pred_check
          %p131 = pneg %p32
        $region26: #{tpu_custom_call.1} parent=23 // pred_check_branch
          %133 = sbr.rel (%p131) target = $region28
        $region27: #{tpu_custom_call.1} parent=23 // pred_region
          %s134 = smul.u32 16, %s12
          %p135 = scmp.lt.s32.totalorder %s134, 31
          %s136 = scalar_select %p135, %s134, 31
          %s137 = smul.addr %s136, 8
          %s138 = scalar_lea.vmem %s0, %s137
          %s139 = smul.u32 16, %s12
        $region28: #{tpu_custom_call.1} parent=23 // pred_fallthru
          _
      $region24: #{tpu_custom_call.1} parent=5 // pred_fallthru
        _
      %p140 = scmp.le.s32.totalorder 1, %s12
      %p141 = scmp.lt.s32.totalorder %s12, 3
      %p142 = pnand %p140, %p141
      %p143 = pneg %p142
      // Predicated region
      $region29: #{tpu_custom_call.1} parent=5 // pred_check
        _
      $region30: #{tpu_custom_call.1} parent=5 // pred_check_branch
        %145 = sbr.rel (%p142) target = $region32
      $region31: #{tpu_custom_call.1} parent=5 // pred_region
        %s146 = ssub.s32 %s12, 1
        %s147 = smul.u32 16, %s17
        %p148 = scmp.lt.s32.totalorder %s147, 31
        %s149 = scalar_select %p148, %s147, 31
        %s150 = smul.addr %s149, 8
        %s151 = scalar_lea.vmem %s0, %s150
        %p152 = pneg %p38
        %p153 = pneg %p35
        %p154 = pneg %p59
        %p155 = pneg %p56
        %p156 = pneg %p80
        %p157 = pneg %p77
        %p158 = pneg %p106
        %p159 = pneg %p103
        %s160 = sand.u32 %s93, 1
        %s161 = scalar_lea.sflag [#allocation3], %s160
        %s162 = sand.u32 %s93, 1
        %s163 = smul.addr %s162, 128
        %s164 = scalar_lea.vmem [#allocation2], %s163
        %s165 = smul.u32 16, %s17
        %p166 = scmp.lt.s32.totalorder %s165, 31
        %s167 = scalar_select %p166, %s165, 31
        %s168 = smul.addr %s167, 8
        %s169 = scalar_lea.vmem %s0, %s168
        %s170 = smul.u32 16, %s17
        %s171 = smul.u32 16, %s17
        %v172 = vld [vmem:[%s169] sm:$0xff]
        %v173 = vld [vmem:[%s169 + $0x8] sm:$0xff]
        %v174 = vld [vmem:[%s169 + $0x10] sm:$0xff]
        %v175 = vld [vmem:[%s169 + $0x18] sm:$0xff]
        %v176 = vld [vmem:[%s169 + $0x20] sm:$0xff]
        %v177 = vld [vmem:[%s169 + $0x28] sm:$0xff]
        %v178 = vld [vmem:[%s169 + $0x30] sm:$0xff]
        %v179 = vld [vmem:[%s169 + $0x38] sm:$0xff]
        %v180 = vld [vmem:[%s169 + $0x40] sm:$0xff]
        %v181 = vld [vmem:[%s169 + $0x48] sm:$0xff]
        %v182 = vld [vmem:[%s169 + $0x50] sm:$0xff]
        %v183 = vld [vmem:[%s169 + $0x58] sm:$0xff]
        %v184 = vld [vmem:[%s169 + $0x60] sm:$0xff]
        %v185 = vld [vmem:[%s169 + $0x68] sm:$0xff]
        %v186 = vld [vmem:[%s169 + $0x70] sm:$0xff]
        %v187 = vld [vmem:[%s169 + $0x78] sm:$0xff]
        %v188 = vld [vmem:[%s1] sm:$0xff]
        %v189 = vld [vmem:[%s1 + $0x8] sm:$0xff]
        %v190 = vld [vmem:[%s1 + $0x10] sm:$0xff]
        %v191 = vld [vmem:[%s1 + $0x18] sm:$0xff]
        %v192 = vld [vmem:[%s1 + $0x20] sm:$0xff]
        %v193 = vld [vmem:[%s1 + $0x28] sm:$0xff]
        %v194 = vld [vmem:[%s1 + $0x30] sm:$0xff]
        %v195 = vld [vmem:[%s1 + $0x38] sm:$0xff]
        %v196 = vld [vmem:[%s1 + $0x40] sm:$0xff]
        %v197 = vld [vmem:[%s1 + $0x48] sm:$0xff]
        %v198 = vld [vmem:[%s1 + $0x50] sm:$0xff]
        %v199 = vld [vmem:[%s1 + $0x58] sm:$0xff]
        %v200 = vld [vmem:[%s1 + $0x60] sm:$0xff]
        %v201 = vld [vmem:[%s1 + $0x68] sm:$0xff]
        %v202 = vld [vmem:[%s1 + $0x70] sm:$0xff]
        %v203 = vld [vmem:[%s1 + $0x78] sm:$0xff]
        %v204 = vld [vmem:[%s1 + $0x80] sm:$0xff]
        %v205 = vld [vmem:[%s1 + $0x88] sm:$0xff]
        %v206 = vld [vmem:[%s1 + $0x90] sm:$0xff]
        %v207 = vld [vmem:[%s1 + $0x98] sm:$0xff]
        %v208 = vld [vmem:[%s1 + $0xa0] sm:$0xff]
        %v209 = vld [vmem:[%s1 + $0xa8] sm:$0xff]
        %v210 = vld [vmem:[%s1 + $0xb0] sm:$0xff]
        %v211 = vld [vmem:[%s1 + $0xb8] sm:$0xff]
        %v212 = vld [vmem:[%s1 + $0xc0] sm:$0xff]
        %v213 = vld [vmem:[%s1 + $0xc8] sm:$0xff]
        %v214 = vld [vmem:[%s1 + $0xd0] sm:$0xff]
        %v215 = vld [vmem:[%s1 + $0xd8] sm:$0xff]
        %v216 = vld [vmem:[%s1 + $0xe0] sm:$0xff]
        %v217 = vld [vmem:[%s1 + $0xe8] sm:$0xff]
        %v218 = vld [vmem:[%s1 + $0xf0] sm:$0xff]
        %v219 = vld [vmem:[%s1 + $0xf8] sm:$0xff]
        %v220 = vld [vmem:[%s1 + $0x100] sm:$0xff]
        %v221 = vld [vmem:[%s1 + $0x108] sm:$0xff]
        %v222 = vld [vmem:[%s2] sm:$0x1]
        %v223 = vld [vmem:[%s2 + $0x1] sm:$0x1]
        %v224 = vld [vmem:[%s2 + $0x2] sm:$0x1]
        %v225 = vlaneseq
        %v226 = vshrl.u32 %v225, 7
        %v227 = vsub.s32 0, %v226
        %v228 = vrot.slane %v222, %v227
        %vm229 = vcmask 130048
        %v231 = vsel %vm229, %v172, 0
        %v234 = vsel %vm229, %v173, 0
        %v237 = vsel %vm229, %v174, 0
        %v240 = vsel %vm229, %v175, 0
        %v243 = vsel %vm229, %v176, 0
        %v246 = vsel %vm229, %v177, 0
        %v249 = vsel %vm229, %v178, 0
        %v252 = vsel %vm229, %v179, 0
        %v255 = vsel %vm229, %v180, 0
        %v258 = vsel %vm229, %v181, 0
        %v261 = vsel %vm229, %v182, 0
        %v264 = vsel %vm229, %v183, 0
        %v267 = vsel %vm229, %v184, 0
        %v270 = vsel %vm229, %v185, 0
        %v273 = vsel %vm229, %v186, 0
        %v276 = vsel %vm229, %v187, 0
        %278 = vmatprep.subr.mxu0 0.0
        %279 = vmatpush1.msra.mxu0 %v188
        %280 = vmatprep.subr.mxu0 0.0
        %281 = vmatpush1.msra.mxu0 %v189
        %282 = vmatprep.subr.mxu0 0.0
        %283 = vmatpush1.msra.mxu0 0.0
        %284 = vmatprep.subr.mxu0 0.0
        %285 = vmatpush1.msra.mxu0 0.0
        %286 = vmatprep.subr.mxu0 0.0
        %287 = vmatpush1.msra.mxu0 0.0
        %288 = vmatprep.subr.mxu0 0.0
        %289 = vmatpush1.msra.mxu0 0.0
        %290 = vmatprep.subr.mxu0 0.0
        %291 = vmatpush1.msra.mxu0 0.0
        %292 = vmatprep.subr.mxu0 0.0
        %293 = vmatpush1.msra.mxu0 0.0
        %294 = vmatprep.subr.mxu0 0.0
        %295 = vmatpush1.msra.mxu0 0.0
        %296 = vmatprep.subr.mxu0 0.0
        %297 = vmatpush1.msra.mxu0 0.0
        %298 = vmatprep.subr.mxu0 0.0
        %299 = vmatpush1.msra.mxu0 0.0
        %300 = vmatprep.subr.mxu0 0.0
        %301 = vmatpush1.msra.mxu0 0.0
        %302 = vmatprep.subr.mxu0 0.0
        %303 = vmatpush1.msra.mxu0 0.0
        %304 = vmatprep.subr.mxu0 0.0
        %305 = vmatpush1.msra.mxu0 0.0
        %306 = vmatprep.subr.mxu0 0.0
        %307 = vmatpush1.msra.mxu0 0.0
        %308 = vmatprep.subr.mxu0 0.0
        %309 = vmatpush1.msra.mxu0 0.0
        %310 = vmatprep.subr.mxu0 0.0
        %311 = vmatpush1.msra.mxu0 0.0
        %312 = vmatprep.subr.mxu0 0.0
        %313 = vmatpush1.msra.mxu0 0.0
        %314 = vmatprep.subr.mxu0 0.0
        %315 = vmatpush1.msra.mxu0 0.0
        %316 = vmatprep.subr.mxu0 0.0
        %317 = vmatpush1.msra.mxu0 0.0
        %318 = vmatprep.subr.mxu0 0.0
        %319 = vmatpush1.msra.mxu0 0.0
        %320 = vmatprep.subr.mxu0 0.0
        %321 = vmatpush1.msra.mxu0 0.0
        %322 = vmatprep.subr.mxu0 0.0
        %323 = vmatpush1.msra.mxu0 0.0
        %324 = vmatprep.subr.mxu0 0.0
        %325 = vmatpush1.msra.mxu0 0.0
        %326 = vmatprep.subr.mxu0 0.0
        %327 = vmatpush1.msra.mxu0 0.0
        %328 = vmatprep.subr.mxu0 0.0
        %329 = vmatpush1.msra.mxu0 0.0
        %330 = vmatprep.subr.mxu0 0.0
        %331 = vmatpush1.msra.mxu0 0.0
        %332 = vmatprep.subr.mxu0 0.0
        %333 = vmatpush1.msra.mxu0 0.0
        %334 = vmatprep.subr.mxu0 0.0
        %335 = vmatpush1.msra.mxu0 0.0
        %336 = vmatprep.subr.mxu0 0.0
        %337 = vmatpush1.msra.mxu0 0.0
        %338 = vmatprep.subr.mxu0 0.0
        %339 = vmatpush1.msra.mxu0 0.0
        %340 = vmatprep.subr.mxu0 0.0
        %341 = vmatpush1.msra.mxu0 0.0
        %342 = vmatprep.mubr.f32.mxu0 0.0
        %343 = vmatmul.mubr.f32.gmra.mrb[0].mxu0 %v231
        %v344 = vpop.f32.mrb[0].mxu0
        %v345 = vadd.f32 %v228, %v344
        %v346 = vpop.f32.mrb[0].mxu0
        %347 = vmatprep.mubr.f32.mxu0 0.0
        %348 = vmatmul.mubr.f32.gmra.mrb[0].mxu0 %v234
        %v349 = vpop.f32.mrb[0].mxu0
        %v350 = vadd.f32 %v228, %v349
        %v351 = vpop.f32.mrb[0].mxu0
        %352 = vmatprep.mubr.f32.mxu0 0.0
        %353 = vmatmul.mubr.f32.gmra.mrb[0].mxu0 %v237
        %v354 = vpop.f32.mrb[0].mxu0
        %v355 = vadd.f32 %v228, %v354
        %v356 = vpop.f32.mrb[0].mxu0
        %357 = vmatprep.mubr.f32.mxu0 0.0
        %358 = vmatmul.mubr.f32.gmra.mrb[0].mxu0 %v240
        %v359 = vpop.f32.mrb[0].mxu0
        %v360 = vadd.f32 %v228, %v359
        %v361 = vpop.f32.mrb[0].mxu0
        %362 = vmatprep.mubr.f32.mxu0 0.0
        %363 = vmatmul.mubr.f32.gmra.mrb[0].mxu0 %v243
        %v364 = vpop.f32.mrb[0].mxu0
        %v365 = vadd.f32 %v228, %v364
        %v366 = vpop.f32.mrb[0].mxu0
        %367 = vmatprep.mubr.f32.mxu0 0.0
        %368 = vmatmul.mubr.f32.gmra.mrb[0].mxu0 %v246
        %v369 = vpop.f32.mrb[0].mxu0
        %v370 = vadd.f32 %v228, %v369
        %v371 = vpop.f32.mrb[0].mxu0
        %372 = vmatprep.mubr.f32.mxu0 0.0
        %373 = vmatmul.mubr.f32.gmra.mrb[0].mxu0 %v249
        %v374 = vpop.f32.mrb[0].mxu0
        %v375 = vadd.f32 %v228, %v374
        %v376 = vpop.f32.mrb[0].mxu0
        %377 = vmatprep.mubr.f32.mxu0 0.0
        %378 = vmatmul.mubr.f32.gmra.mrb[0].mxu0 %v252
        %v379 = vpop.f32.mrb[0].mxu0
        %v380 = vadd.f32 %v228, %v379
        %v381 = vpop.f32.mrb[0].mxu0
        %382 = vmatprep.mubr.f32.mxu0 0.0
        %383 = vmatmul.mubr.f32.gmra.mrb[0].mxu0 %v255
        %v384 = vpop.f32.mrb[0].mxu0
        %v385 = vadd.f32 %v228, %v384
        %v386 = vpop.f32.mrb[0].mxu0
        %387 = vmatprep.mubr.f32.mxu0 0.0
        %388 = vmatmul.mubr.f32.gmra.mrb[0].mxu0 %v258
        %v389 = vpop.f32.mrb[0].mxu0
        %v390 = vadd.f32 %v228, %v389
        %v391 = vpop.f32.mrb[0].mxu0
        %392 = vmatprep.mubr.f32.mxu0 0.0
        %393 = vmatmul.mubr.f32.gmra.mrb[0].mxu0 %v261
        %v394 = vpop.f32.mrb[0].mxu0
        %v395 = vadd.f32 %v228, %v394
        %v396 = vpop.f32.mrb[0].mxu0
        %397 = vmatprep.mubr.f32.mxu0 0.0
        %398 = vmatmul.mubr.f32.gmra.mrb[0].mxu0 %v264
        %v399 = vpop.f32.mrb[0].mxu0
        %v400 = vadd.f32 %v228, %v399
        %v401 = vpop.f32.mrb[0].mxu0
        %402 = vmatprep.mubr.f32.mxu0 0.0
        %403 = vmatmul.mubr.f32.gmra.mrb[0].mxu0 %v267
        %v404 = vpop.f32.mrb[0].mxu0
        %v405 = vadd.f32 %v228, %v404
        %v406 = vpop.f32.mrb[0].mxu0
        %407 = vmatprep.mubr.f32.mxu0 0.0
        %408 = vmatmul.mubr.f32.gmra.mrb[0].mxu0 %v270
        %v409 = vpop.f32.mrb[0].mxu0
        %v410 = vadd.f32 %v228, %v409
        %v411 = vpop.f32.mrb[0].mxu0
        %412 = vmatprep.mubr.f32.mxu0 0.0
        %413 = vmatmul.mubr.f32.gmra.mrb[0].mxu0 %v273
        %v414 = vpop.f32.mrb[0].mxu0
        %v415 = vadd.f32 %v228, %v414
        %v416 = vpop.f32.mrb[0].mxu0
        %417 = vmatprep.mubr.f32.mxu0 0.0
        %418 = vmatmul.mubr.f32.gmra.mrb[0].mxu0 %v276
        %v419 = vpop.f32.mrb[0].mxu0
        %v420 = vadd.f32 %v228, %v419
        %v421 = vpop.f32.mrb[0].mxu0
        %422 = vdwg.mxu0
        %v423 = vtanh.pop %v345
        %v424 = vtanh.pop %v350
        %v425 = vtanh.pop %v355
        %v426 = vtanh.pop %v360
        %v427 = vtanh.pop %v365
        %v428 = vtanh.pop %v370
        %v429 = vtanh.pop %v375
        %v430 = vtanh.pop %v380
        %v431 = vtanh.pop %v385
        %v432 = vtanh.pop %v390
        %v433 = vtanh.pop %v395
        %v434 = vtanh.pop %v400
        %v435 = vtanh.pop %v405
        %v436 = vtanh.pop %v410
        %v437 = vtanh.pop %v415
        %v438 = vtanh.pop %v420
        %v439 = vlaneseq
        %v440 = vshrl.u32 %v439, 7
        %v441 = vsub.s32 0, %v440
        %v442 = vrot.slane %v223, %v441
        %443 = vmatprep.subr.mxu0 0.0
        %444 = vmatpush1.msra.mxu0 %v190
        %445 = vmatprep.subr.mxu0 0.0
        %446 = vmatpush1.msra.mxu0 %v191
        %447 = vmatprep.subr.mxu0 0.0
        %448 = vmatpush1.msra.mxu0 %v192
        %449 = vmatprep.subr.mxu0 0.0
        %450 = vmatpush1.msra.mxu0 %v193
        %451 = vmatprep.subr.mxu0 0.0
        %452 = vmatpush1.msra.mxu0 %v194
        %453 = vmatprep.subr.mxu0 0.0
        %454 = vmatpush1.msra.mxu0 %v195
        %455 = vmatprep.subr.mxu0 0.0
        %456 = vmatpush1.msra.mxu0 %v196
        %457 = vmatprep.subr.mxu0 0.0
        %458 = vmatpush1.msra.mxu0 %v197
        %459 = vmatprep.subr.mxu0 0.0
        %460 = vmatpush1.msra.mxu0 %v198
        %461 = vmatprep.subr.mxu0 0.0
        %462 = vmatpush1.msra.mxu0 %v199
        %463 = vmatprep.subr.mxu0 0.0
        %464 = vmatpush1.msra.mxu0 %v200
        %465 = vmatprep.subr.mxu0 0.0
        %466 = vmatpush1.msra.mxu0 %v201
        %467 = vmatprep.subr.mxu0 0.0
        %468 = vmatpush1.msra.mxu0 %v202
        %469 = vmatprep.subr.mxu0 0.0
        %470 = vmatpush1.msra.mxu0 %v203
        %471 = vmatprep.subr.mxu0 0.0
        %472 = vmatpush1.msra.mxu0 %v204
        %473 = vmatprep.subr.mxu0 0.0
        %474 = vmatpush1.msra.mxu0 %v205
        %475 = vmatprep.subr.mxu0 0.0
        %476 = vmatpush1.msra.mxu0 0.0
        %477 = vmatprep.subr.mxu0 0.0
        %478 = vmatpush1.msra.mxu0 0.0
        %479 = vmatprep.subr.mxu0 0.0
        %480 = vmatpush1.msra.mxu0 0.0
        %481 = vmatprep.subr.mxu0 0.0
        %482 = vmatpush1.msra.mxu0 0.0
        %483 = vmatprep.subr.mxu0 0.0
        %484 = vmatpush1.msra.mxu0 0.0
        %485 = vmatprep.subr.mxu0 0.0
        %486 = vmatpush1.msra.mxu0 0.0
        %487 = vmatprep.subr.mxu0 0.0
        %488 = vmatpush1.msra.mxu0 0.0
        %489 = vmatprep.subr.mxu0 0.0
        %490 = vmatpush1.msra.mxu0 0.0
        %491 = vmatprep.subr.mxu0 0.0
        %492 = vmatpush1.msra.mxu0 0.0
        %493 = vmatprep.subr.mxu0 0.0
        %494 = vmatpush1.msra.mxu0 0.0
        %495 = vmatprep.subr.mxu0 0.0
        %496 = vmatpush1.msra.mxu0 0.0
        %497 = vmatprep.subr.mxu0 0.0
        %498 = vmatpush1.msra.mxu0 0.0
        %499 = vmatprep.subr.mxu0 0.0
        %500 = vmatpush1.msra.mxu0 0.0
        %501 = vmatprep.subr.mxu0 0.0
        %502 = vmatpush1.msra.mxu0 0.0
        %503 = vmatprep.subr.mxu0 0.0
        %504 = vmatpush1.msra.mxu0 0.0
        %505 = vmatprep.subr.mxu0 0.0
        %506 = vmatpush1.msra.mxu0 0.0
        %507 = vmatprep.mubr.f32.mxu0 0.0
        %508 = vmatmul.mubr.f32.gmra.mrb[0].mxu0 %v423
        %v509 = vpop.f32.mrb[0].mxu0
        %v510 = vadd.f32 %v442, %v509
        %v511 = vpop.f32.mrb[0].mxu0
        %512 = vmatprep.mubr.f32.mxu0 0.0
        %513 = vmatmul.mubr.f32.gmra.mrb[0].mxu0 %v424
        %v514 = vpop.f32.mrb[0].mxu0
        %v515 = vadd.f32 %v442, %v514
        %v516 = vpop.f32.mrb[0].mxu0
        %517 = vmatprep.mubr.f32.mxu0 0.0
        %518 = vmatmul.mubr.f32.gmra.mrb[0].mxu0 %v425
        %v519 = vpop.f32.mrb[0].mxu0
        %v520 = vadd.f32 %v442, %v519
        %v521 = vpop.f32.mrb[0].mxu0
        %522 = vmatprep.mubr.f32.mxu0 0.0
        %523 = vmatmul.mubr.f32.gmra.mrb[0].mxu0 %v426
        %v524 = vpop.f32.mrb[0].mxu0
        %v525 = vadd.f32 %v442, %v524
        %v526 = vpop.f32.mrb[0].mxu0
        %527 = vmatprep.mubr.f32.mxu0 0.0
        %528 = vmatmul.mubr.f32.gmra.mrb[0].mxu0 %v427
        %v529 = vpop.f32.mrb[0].mxu0
        %v530 = vadd.f32 %v442, %v529
        %v531 = vpop.f32.mrb[0].mxu0
        %532 = vmatprep.mubr.f32.mxu0 0.0
        %533 = vmatmul.mubr.f32.gmra.mrb[0].mxu0 %v428
        %v534 = vpop.f32.mrb[0].mxu0
        %v535 = vadd.f32 %v442, %v534
        %v536 = vpop.f32.mrb[0].mxu0
        %537 = vmatprep.mubr.f32.mxu0 0.0
        %538 = vmatmul.mubr.f32.gmra.mrb[0].mxu0 %v429
        %v539 = vpop.f32.mrb[0].mxu0
        %v540 = vadd.f32 %v442, %v539
        %v541 = vpop.f32.mrb[0].mxu0
        %542 = vmatprep.mubr.f32.mxu0 0.0
        %543 = vmatmul.mubr.f32.gmra.mrb[0].mxu0 %v430
        %v544 = vpop.f32.mrb[0].mxu0
        %v545 = vadd.f32 %v442, %v544
        %v546 = vpop.f32.mrb[0].mxu0
        %547 = vmatprep.mubr.f32.mxu0 0.0
        %548 = vmatmul.mubr.f32.gmra.mrb[0].mxu0 %v431
        %v549 = vpop.f32.mrb[0].mxu0
        %v550 = vadd.f32 %v442, %v549
        %v551 = vpop.f32.mrb[0].mxu0
        %552 = vmatprep.mubr.f32.mxu0 0.0
        %553 = vmatmul.mubr.f32.gmra.mrb[0].mxu0 %v432
        %v554 = vpop.f32.mrb[0].mxu0
        %v555 = vadd.f32 %v442, %v554
        %v556 = vpop.f32.mrb[0].mxu0
        %557 = vmatprep.mubr.f32.mxu0 0.0
        %558 = vmatmul.mubr.f32.gmra.mrb[0].mxu0 %v433
        %v559 = vpop.f32.mrb[0].mxu0
        %v560 = vadd.f32 %v442, %v559
        %v561 = vpop.f32.mrb[0].mxu0
        %562 = vmatprep.mubr.f32.mxu0 0.0
        %563 = vmatmul.mubr.f32.gmra.mrb[0].mxu0 %v434
        %v564 = vpop.f32.mrb[0].mxu0
        %v565 = vadd.f32 %v442, %v564
        %v566 = vpop.f32.mrb[0].mxu0
        %567 = vmatprep.mubr.f32.mxu0 0.0
        %568 = vmatmul.mubr.f32.gmra.mrb[0].mxu0 %v435
        %v569 = vpop.f32.mrb[0].mxu0
        %v570 = vadd.f32 %v442, %v569
        %v571 = vpop.f32.mrb[0].mxu0
        %572 = vmatprep.mubr.f32.mxu0 0.0
        %573 = vmatmul.mubr.f32.gmra.mrb[0].mxu0 %v436
        %v574 = vpop.f32.mrb[0].mxu0
        %v575 = vadd.f32 %v442, %v574
        %v576 = vpop.f32.mrb[0].mxu0
        %577 = vmatprep.mubr.f32.mxu0 0.0
        %578 = vmatmul.mubr.f32.gmra.mrb[0].mxu0 %v437
        %v579 = vpop.f32.mrb[0].mxu0
        %v580 = vadd.f32 %v442, %v579
        %v581 = vpop.f32.mrb[0].mxu0
        %582 = vmatprep.mubr.f32.mxu0 0.0
        %583 = vmatmul.mubr.f32.gmra.mrb[0].mxu0 %v438
        %v584 = vpop.f32.mrb[0].mxu0
        %v585 = vadd.f32 %v442, %v584
        %v586 = vpop.f32.mrb[0].mxu0
        %587 = vdwg.mxu0
        %v588 = vtanh.pop %v510
        %v589 = vtanh.pop %v515
        %v590 = vtanh.pop %v520
        %v591 = vtanh.pop %v525
        %v592 = vtanh.pop %v530
        %v593 = vtanh.pop %v535
        %v594 = vtanh.pop %v540
        %v595 = vtanh.pop %v545
        %v596 = vtanh.pop %v550
        %v597 = vtanh.pop %v555
        %v598 = vtanh.pop %v560
        %v599 = vtanh.pop %v565
        %v600 = vtanh.pop %v570
        %v601 = vtanh.pop %v575
        %v602 = vtanh.pop %v580
        %v603 = vtanh.pop %v585
        %v604 = vlaneseq
        %v605 = vshrl.u32 %v604, 7
        %v606 = vsub.s32 0, %v605
        %v607 = vrot.slane %v224, %v606
        %608 = vmatprep.subr.mxu0 0.0
        %609 = vmatpush1.msra.mxu0 %v206
        %610 = vmatprep.subr.mxu0 0.0
        %611 = vmatpush1.msra.mxu0 %v207
        %612 = vmatprep.subr.mxu0 0.0
        %613 = vmatpush1.msra.mxu0 %v208
        %614 = vmatprep.subr.mxu0 0.0
        %615 = vmatpush1.msra.mxu0 %v209
        %616 = vmatprep.subr.mxu0 0.0
        %617 = vmatpush1.msra.mxu0 %v210
        %618 = vmatprep.subr.mxu0 0.0
        %619 = vmatpush1.msra.mxu0 %v211
        %620 = vmatprep.subr.mxu0 0.0
        %621 = vmatpush1.msra.mxu0 %v212
        %622 = vmatprep.subr.mxu0 0.0
        %623 = vmatpush1.msra.mxu0 %v213
        %624 = vmatprep.subr.mxu0 0.0
        %625 = vmatpush1.msra.mxu0 %v214
        %626 = vmatprep.subr.mxu0 0.0
        %627 = vmatpush1.msra.mxu0 %v215
        %628 = vmatprep.subr.mxu0 0.0
        %629 = vmatpush1.msra.mxu0 %v216
        %630 = vmatprep.subr.mxu0 0.0
        %631 = vmatpush1.msra.mxu0 %v217
        %632 = vmatprep.subr.mxu0 0.0
        %633 = vmatpush1.msra.mxu0 %v218
        %634 = vmatprep.subr.mxu0 0.0
        %635 = vmatpush1.msra.mxu0 %v219
        %636 = vmatprep.subr.mxu0 0.0
        %637 = vmatpush1.msra.mxu0 %v220
        %638 = vmatprep.subr.mxu0 0.0
        %639 = vmatpush1.msra.mxu0 %v221
        %640 = vmatprep.subr.mxu0 0.0
        %641 = vmatpush1.msra.mxu0 0.0
        %642 = vmatprep.subr.mxu0 0.0
        %643 = vmatpush1.msra.mxu0 0.0
        %644 = vmatprep.subr.mxu0 0.0
        %645 = vmatpush1.msra.mxu0 0.0
        %646 = vmatprep.subr.mxu0 0.0
        %647 = vmatpush1.msra.mxu0 0.0
        %648 = vmatprep.subr.mxu0 0.0
        %649 = vmatpush1.msra.mxu0 0.0
        %650 = vmatprep.subr.mxu0 0.0
        %651 = vmatpush1.msra.mxu0 0.0
        %652 = vmatprep.subr.mxu0 0.0
        %653 = vmatpush1.msra.mxu0 0.0
        %654 = vmatprep.subr.mxu0 0.0
        %655 = vmatpush1.msra.mxu0 0.0
        %656 = vmatprep.subr.mxu0 0.0
        %657 = vmatpush1.msra.mxu0 0.0
        %658 = vmatprep.subr.mxu0 0.0
        %659 = vmatpush1.msra.mxu0 0.0
        %660 = vmatprep.subr.mxu0 0.0
        %661 = vmatpush1.msra.mxu0 0.0
        %662 = vmatprep.subr.mxu0 0.0
        %663 = vmatpush1.msra.mxu0 0.0
        %664 = vmatprep.subr.mxu0 0.0
        %665 = vmatpush1.msra.mxu0 0.0
        %666 = vmatprep.subr.mxu0 0.0
        %667 = vmatpush1.msra.mxu0 0.0
        %668 = vmatprep.subr.mxu0 0.0
        %669 = vmatpush1.msra.mxu0 0.0
        %670 = vmatprep.subr.mxu0 0.0
        %671 = vmatpush1.msra.mxu0 0.0
        %672 = vmatprep.mubr.f32.mxu0 0.0
        %673 = vmatmul.mubr.f32.gmra.mrb[0].mxu0 %v588
        %v674 = vpop.f32.mrb[0].mxu0
        %v675 = vadd.f32 %v607, %v674
        %v676 = vpop.f32.mrb[0].mxu0
        %677 = vmatprep.mubr.f32.mxu0 0.0
        %678 = vmatmul.mubr.f32.gmra.mrb[0].mxu0 %v589
        %v679 = vpop.f32.mrb[0].mxu0
        %v680 = vadd.f32 %v607, %v679
        %v681 = vpop.f32.mrb[0].mxu0
        %682 = vmatprep.mubr.f32.mxu0 0.0
        %683 = vmatmul.mubr.f32.gmra.mrb[0].mxu0 %v590
        %v684 = vpop.f32.mrb[0].mxu0
        %v685 = vadd.f32 %v607, %v684
        %v686 = vpop.f32.mrb[0].mxu0
        %687 = vmatprep.mubr.f32.mxu0 0.0
        %688 = vmatmul.mubr.f32.gmra.mrb[0].mxu0 %v591
        %v689 = vpop.f32.mrb[0].mxu0
        %v690 = vadd.f32 %v607, %v689
        %v691 = vpop.f32.mrb[0].mxu0
        %692 = vmatprep.mubr.f32.mxu0 0.0
        %693 = vmatmul.mubr.f32.gmra.mrb[0].mxu0 %v592
        %v694 = vpop.f32.mrb[0].mxu0
        %v695 = vadd.f32 %v607, %v694
        %v696 = vpop.f32.mrb[0].mxu0
        %697 = vmatprep.mubr.f32.mxu0 0.0
        %698 = vmatmul.mubr.f32.gmra.mrb[0].mxu0 %v593
        %v699 = vpop.f32.mrb[0].mxu0
        %v700 = vadd.f32 %v607, %v699
        %v701 = vpop.f32.mrb[0].mxu0
        %702 = vmatprep.mubr.f32.mxu0 0.0
        %703 = vmatmul.mubr.f32.gmra.mrb[0].mxu0 %v594
        %v704 = vpop.f32.mrb[0].mxu0
        %v705 = vadd.f32 %v607, %v704
        %v706 = vpop.f32.mrb[0].mxu0
        %707 = vmatprep.mubr.f32.mxu0 0.0
        %708 = vmatmul.mubr.f32.gmra.mrb[0].mxu0 %v595
        %v709 = vpop.f32.mrb[0].mxu0
        %v710 = vadd.f32 %v607, %v709
        %v711 = vpop.f32.mrb[0].mxu0
        %712 = vmatprep.mubr.f32.mxu0 0.0
        %713 = vmatmul.mubr.f32.gmra.mrb[0].mxu0 %v596
        %v714 = vpop.f32.mrb[0].mxu0
        %v715 = vadd.f32 %v607, %v714
        %v716 = vpop.f32.mrb[0].mxu0
        %717 = vmatprep.mubr.f32.mxu0 0.0
        %718 = vmatmul.mubr.f32.gmra.mrb[0].mxu0 %v597
        %v719 = vpop.f32.mrb[0].mxu0
        %v720 = vadd.f32 %v607, %v719
        %v721 = vpop.f32.mrb[0].mxu0
        %722 = vmatprep.mubr.f32.mxu0 0.0
        %723 = vmatmul.mubr.f32.gmra.mrb[0].mxu0 %v598
        %v724 = vpop.f32.mrb[0].mxu0
        %v725 = vadd.f32 %v607, %v724
        %v726 = vpop.f32.mrb[0].mxu0
        %727 = vmatprep.mubr.f32.mxu0 0.0
        %728 = vmatmul.mubr.f32.gmra.mrb[0].mxu0 %v599
        %v729 = vpop.f32.mrb[0].mxu0
        %v730 = vadd.f32 %v607, %v729
        %v731 = vpop.f32.mrb[0].mxu0
        %732 = vmatprep.mubr.f32.mxu0 0.0
        %733 = vmatmul.mubr.f32.gmra.mrb[0].mxu0 %v600
        %v734 = vpop.f32.mrb[0].mxu0
        %v735 = vadd.f32 %v607, %v734
        %v736 = vpop.f32.mrb[0].mxu0
        %737 = vmatprep.mubr.f32.mxu0 0.0
        %738 = vmatmul.mubr.f32.gmra.mrb[0].mxu0 %v601
        %v739 = vpop.f32.mrb[0].mxu0
        %v740 = vadd.f32 %v607, %v739
        %v741 = vpop.f32.mrb[0].mxu0
        %742 = vmatprep.mubr.f32.mxu0 0.0
        %743 = vmatmul.mubr.f32.gmra.mrb[0].mxu0 %v602
        %v744 = vpop.f32.mrb[0].mxu0
        %v745 = vadd.f32 %v607, %v744
        %v746 = vpop.f32.mrb[0].mxu0
        %747 = vmatprep.mubr.f32.mxu0 0.0
        %748 = vmatmul.mubr.f32.gmra.mrb[0].mxu0 %v603
        %v749 = vpop.f32.mrb[0].mxu0
        %v750 = vadd.f32 %v607, %v749
        %v751 = vpop.f32.mrb[0].mxu0
        %752 = vdwg.mxu0
        %753 = vst [vmem:[%s164] sm:$0xff] %v675
        %754 = vst [vmem:[%s164 + $0x8] sm:$0xff] %v680
        %755 = vst [vmem:[%s164 + $0x10] sm:$0xff] %v685
        %756 = vst [vmem:[%s164 + $0x18] sm:$0xff] %v690
        %757 = vst [vmem:[%s164 + $0x20] sm:$0xff] %v695
        %758 = vst [vmem:[%s164 + $0x28] sm:$0xff] %v700
        %759 = vst [vmem:[%s164 + $0x30] sm:$0xff] %v705
        %760 = vst [vmem:[%s164 + $0x38] sm:$0xff] %v710
        %761 = vst [vmem:[%s164 + $0x40] sm:$0xff] %v715
        %762 = vst [vmem:[%s164 + $0x48] sm:$0xff] %v720
        %763 = vst [vmem:[%s164 + $0x50] sm:$0xff] %v725
        %764 = vst [vmem:[%s164 + $0x58] sm:$0xff] %v730
        %765 = vst [vmem:[%s164 + $0x60] sm:$0xff] %v735
        %766 = vst [vmem:[%s164 + $0x68] sm:$0xff] %v740
        %767 = vst [vmem:[%s164 + $0x70] sm:$0xff] %v745
        %768 = vst [vmem:[%s164 + $0x78] sm:$0xff] %v750
        %s769 = sand.u32 %s93, 1
        %s770 = scalar_lea.sflag [#allocation3], %s769
        %s771 = sand.u32 %s93, 1
        %s772 = smul.addr %s771, 128
        %s773 = scalar_lea.vmem [#allocation2], %s772
        // Predicated region
        $region33: #{tpu_custom_call.1} parent=31 // pred_check
          %p774 = pneg %p103
        $region34: #{tpu_custom_call.1} parent=31 // pred_check_branch
          %776 = sbr.rel (%p774) target = $region36
        $region35: #{tpu_custom_call.1} parent=31 // pred_region
          %s777 = smul.u32 16, %s17
          %s779 = ssub.s32 2048, 2048
          %780 = vsyncadd %s770, %s779
          %s781 = smul.addr %s777, 128
          %s782 = scalar_lea.hbm %s3, %s781
          %s783 = sshll.u32 %s773, 4
          %s784 = int_to_ptr.vmem [resolvable:$true] %s783
          %789 = dma.vmem_to_hbm [thread:$0]  %s784, 2048, %s782, %s770, 128, 128, 8
        $region36: #{tpu_custom_call.1} parent=31 // pred_fallthru
          _
      $region32: #{tpu_custom_call.1} parent=5 // pred_fallthru
        _
      %p790 = scmp.le.s32.totalorder 2, %s12
      // Predicated region
      $region37: #{tpu_custom_call.1} parent=5 // pred_check
        %p791 = pneg %p790
      $region38: #{tpu_custom_call.1} parent=5 // pred_check_branch
        %793 = sbr.rel (%p791) target = $region40
      $region39: #{tpu_custom_call.1} parent=5 // pred_region
        %s794 = ssub.s32 %s12, 2
        // Predicated region
        $region41: #{tpu_custom_call.1} parent=39 // pred_check
          %p795 = pneg %p109
        $region42: #{tpu_custom_call.1} parent=39 // pred_check_branch
          %797 = sbr.rel (%p795) target = $region44
        $region43: #{tpu_custom_call.1} parent=39 // pred_region
          %s798 = sand.u32 %s94, 1
          %s799 = scalar_lea.sflag [#allocation3], %s798
          %s800 = sand.u32 %s94, 1
          %s801 = smul.addr %s800, 128
          %s802 = scalar_lea.vmem [#allocation2], %s801
          %803 = dma.done %s799, 2048
        $region44: #{tpu_custom_call.1} parent=39 // pred_fallthru
          _
      $region40: #{tpu_custom_call.1} parent=5 // pred_fallthru
        _
    $region6: #{tpu_custom_call.1} parent=1 // loop_footer
      %s16 = sadd.s32 1, %s12
    $region7: #{tpu_custom_call.1} parent=1 // loop_footer_branch
      %11 = sbr.rel target = $region3
    $region8: #{tpu_custom_call.1} parent=1 // loop_exit
      _
    %804 = vsyncpa [#allocation3], 1
    %s805 = scalar_lea.sflag [#allocation3], 1
    %806 = vsyncpa %s805, 1

</llo_original>
